<compile_context>
chip_gen: v7x
topology: tpu7x:2x2x1
jax: 0.10.0
libtpu: 0.0.40
codegen_flags: <defaults>
</compile_context>

<pallas_src>
import jax
import jax.numpy as jnp
from jax.experimental import pallas as pl
from jax.experimental.pallas import tpu as pltpu

NUM_CLASSES = 10
PADDED_CLASSES = 128  # lane-dense output width


def _round_up(a, b):
    return ((a + b - 1) // b) * b


def classifier_kernel(x_ref, w1_ref, b1_ref, w2_ref, b2_ref, out_ref):
    # x_ref:  (TILE_B, 784) bf16     w1_ref: (784, H) bf16   b1_ref: (1, H) f32
    # w2_ref: (H, 128) bf16          b2_ref: (1, 128) f32    out_ref: (TILE_B, 128) f32
    x = x_ref[...]

    # fc1 (bf16 MXU operands, f32 accumulation) + bias + ReLU in f32
    h = jnp.dot(x, w1_ref[...], preferred_element_type=jnp.float32)
    h = jnp.maximum(h + b1_ref[...], 0.0)

    # fc2 — class dim padded to 128; padded bias columns are -1e30
    logits = (
        jnp.dot(h.astype(jnp.bfloat16), w2_ref[...],
                preferred_element_type=jnp.float32)
        + b2_ref[...]
    )

    # softmax over the (padded) class axis; padded columns underflow to 0
    m = jnp.max(logits, axis=-1, keepdims=True)
    e = jnp.exp(logits - m)
    denom = jnp.sum(e, axis=-1, keepdims=True)
    out_ref[...] = (e * pl.reciprocal(denom, approx=True)).astype(out_ref.dtype)


def classifier_forward(x, w1, b1, w2, b2, *, tile_b=512):
    """x: any shape reshapeable to (-1, 784). Returns (B, 10) softmax probs.

    tile_b: batch tile size. 512 rows of bf16 x is ~0.8 MB per buffer, so the
    double-buffered working set (plus resident weights) is well under the
    scoped-VMEM defaults on v5e/v6e/v7x — no vmem_limit_bytes override needed.
    """
    x2d = x.reshape(-1, 784).astype(jnp.float32)
    B = x2d.shape[0]
    H = w1.shape[1]

    # Tile/pad batch so TILE_B is 8-aligned and divides the padded batch.
    TILE_B = min(tile_b, _round_up(B, 8))
    Bp = _round_up(B, TILE_B)
    if Bp != B:
        x2d = jnp.pad(x2d, ((0, Bp - B), (0, 0)))

    # bf16 operands for the MXU (halves x/w DMA bytes; f32 accumulation kept).
    x_bf = x2d.astype(jnp.bfloat16)
    w1_bf = w1.astype(jnp.bfloat16)

    # Pad class dim 10 -> 128: zero weight columns, -1e30 bias so exp() -> 0.
    w2_p = (
        jnp.zeros((H, PADDED_CLASSES), jnp.bfloat16)
        .at[:, :NUM_CLASSES]
        .set(w2.astype(jnp.bfloat16))
    )
    b2_p = (
        jnp.full((1, PADDED_CLASSES), -1e30, jnp.float32)
        .at[0, :NUM_CLASSES]
        .set(b2.astype(jnp.float32))
    )
    b1_2d = b1.reshape(1, H).astype(jnp.float32)

    out = pl.pallas_call(
        classifier_kernel,
        out_shape=jax.ShapeDtypeStruct((Bp, PADDED_CLASSES), jnp.float32),
        grid_spec=pltpu.PrefetchScalarGridSpec(
            num_scalar_prefetch=0,
            grid=(Bp // TILE_B,),
            in_specs=[
                pl.BlockSpec((TILE_B, 784), lambda i: (i, 0)),          # x (tiled)
                pl.BlockSpec((784, H), lambda i: (0, 0)),               # w1 (resident)
                pl.BlockSpec((1, H), lambda i: (0, 0)),                 # b1 (resident)
                pl.BlockSpec((H, PADDED_CLASSES), lambda i: (0, 0)),    # w2 (resident)
                pl.BlockSpec((1, PADDED_CLASSES), lambda i: (0, 0)),    # b2 (resident)
            ],
            out_specs=pl.BlockSpec((TILE_B, PADDED_CLASSES), lambda i: (i, 0)),
        ),
        compiler_params=pltpu.CompilerParams(
            dimension_semantics=("parallel",),
        ),
    )(x_bf, w1_bf, b1_2d, w2_p, b2_p)

    # Strip batch padding and the padded class columns.
    return out[:B, :NUM_CLASSES]


def classifier_ref(x, w1, b1, w2, b2):
    """Pure-JAX f32 reference matching the PyTorch forward."""
    x2d = x.reshape(-1, 784).astype(jnp.float32)
    h = jnp.maximum(x2d @ w1 + b1, 0.0)
    logits = h @ w2 + b2
    return jax.nn.softmax(logits, axis=-1)


def init_params(key, hidden_dim=256):
    """Deterministic synthetic init matching nn.Linear shapes (pre-transposed)."""
    k1, k2, k3, k4 = jax.random.split(key, 4)
    # PyTorch default init range: U(-1/sqrt(fan_in), 1/sqrt(fan_in))
    lim1 = 1.0 / jnp.sqrt(784.0)
    lim2 = 1.0 / jnp.sqrt(float(hidden_dim))
    w1 = jax.random.uniform(k1, (784, hidden_dim), jnp.float32, -lim1, lim1)
    b1 = jax.random.uniform(k2, (hidden_dim,), jnp.float32, -lim1, lim1)
    w2 = jax.random.uniform(k3, (hidden_dim, NUM_CLASSES), jnp.float32, -lim2, lim2)
    b2 = jax.random.uniform(k4, (NUM_CLASSES,), jnp.float32, -lim2, lim2)
    return w1, b1, w2, b2


if __name__ == "__main__":
    key = jax.random.PRNGKey(0)
    k_x, k_p = jax.random.split(key)

    B, HIDDEN = 8, 256
    # MNIST-style NCHW input (B, 1, 28, 28); forward flattens to (B, 784).
    x = jax.random.normal(k_x, (B, 1, 28, 28), jnp.float32)
    w1, b1, w2, b2 = init_params(k_p, hidden_dim=HIDDEN)

    out = classifier_forward(x, w1, b1, w2, b2)
    out = jax.block_until_ready(out)

    # sanity: shape, softmax rows sum to ~1 (approx reciprocal), close to f32 ref
    assert out.shape == (B, NUM_CLASSES)
    assert jnp.allclose(jnp.sum(out, axis=-1), 1.0, atol=1e-2)
    ref = classifier_ref(x, w1, b1, w2, b2)
    assert jnp.max(jnp.abs(out - ref)) < 5e-2  # bf16 matmul + approx reciprocal
    print("KERNEL_OK")
</pallas_src>

<mosaic_0001>
module attributes {stable_mosaic.version = 11 : i64} {
  func.func @classifier_kernel(%arg0: i32, %arg1: memref<8x784xbf16, #tpu.memory_space<vmem>>, %arg2: memref<784x256xbf16, #tpu.memory_space<vmem>>, %arg3: memref<1x256xf32, #tpu.memory_space<vmem>>, %arg4: memref<256x128xbf16, #tpu.memory_space<vmem>>, %arg5: memref<1x128xf32, #tpu.memory_space<vmem>>, %arg6: memref<8x128xf32, #tpu.memory_space<vmem>>) attributes {dimension_semantics = [#tpu.dimension_semantics<parallel>], iteration_bounds = array<i64: 1>, scalar_prefetch = 0 : i64, scratch_operands = 0 : i64, tpu.core_type = #tpu.core_type<tc>, window_params = [{transform_indices = @transform_0, window_bounds = array<i64: 8, 784>}, {pipeline_mode = #tpu.pipeline_mode<synchronous>, transform_indices = @transform_1, window_bounds = array<i64: 784, 256>}, {pipeline_mode = #tpu.pipeline_mode<synchronous>, transform_indices = @transform_2, window_bounds = array<i64: 1, 256>}, {pipeline_mode = #tpu.pipeline_mode<synchronous>, transform_indices = @transform_3, window_bounds = array<i64: 256, 128>}, {pipeline_mode = #tpu.pipeline_mode<synchronous>, transform_indices = @transform_4, window_bounds = array<i64: 1, 128>}, {transform_indices = @transform_5, window_bounds = array<i64: 8, 128>}]} {
    %c0 = arith.constant 0 : index
    %c0_0 = arith.constant 0 : index
    %0 = vector.load %arg1[%c0, %c0_0] : memref<8x784xbf16, #tpu.memory_space<vmem>>, vector<8x784xbf16>
    %c0_1 = arith.constant 0 : index
    %c0_2 = arith.constant 0 : index
    %1 = vector.load %arg2[%c0_1, %c0_2] : memref<784x256xbf16, #tpu.memory_space<vmem>>, vector<784x256xbf16>
    %cst = arith.constant dense<0.000000e+00> : vector<8x256xf32>
    %2 = tpu.matmul %0, %1, %cst {dimension_numbers = #tpu.dot_dimension_numbers<[1], [0], [0], [1], [0, 0, 1, 1], [], []>} : vector<8x784xbf16>, vector<784x256xbf16>, vector<8x256xf32> -> vector<8x256xf32>
    %c0_3 = arith.constant 0 : index
    %c0_4 = arith.constant 0 : index
    %3 = vector.load %arg3[%c0_3, %c0_4] : memref<1x256xf32, #tpu.memory_space<vmem>>, vector<1x256xf32>
    %4 = vector.broadcast %3 : vector<1x256xf32> to vector<8x256xf32>
    %5 = arith.addf %2, %4 : vector<8x256xf32>
    %cst_5 = arith.constant 0.000000e+00 : f32
    %6 = vector.broadcast %cst_5 : f32 to vector<8x256xf32>
    %7 = arith.maximumf %5, %6 : vector<8x256xf32>
    %8 = arith.truncf %7 : vector<8x256xf32> to vector<8x256xbf16>
    %c0_6 = arith.constant 0 : index
    %c0_7 = arith.constant 0 : index
    %9 = vector.load %arg4[%c0_6, %c0_7] : memref<256x128xbf16, #tpu.memory_space<vmem>>, vector<256x128xbf16>
    %cst_8 = arith.constant dense<0.000000e+00> : vector<8x128xf32>
    %10 = tpu.matmul %8, %9, %cst_8 {dimension_numbers = #tpu.dot_dimension_numbers<[1], [0], [0], [1], [0, 0, 1, 1], [], []>} : vector<8x256xbf16>, vector<256x128xbf16>, vector<8x128xf32> -> vector<8x128xf32>
    %c0_9 = arith.constant 0 : index
    %c0_10 = arith.constant 0 : index
    %11 = vector.load %arg5[%c0_9, %c0_10] : memref<1x128xf32, #tpu.memory_space<vmem>>, vector<1x128xf32>
    %12 = vector.broadcast %11 : vector<1x128xf32> to vector<8x128xf32>
    %13 = arith.addf %10, %12 : vector<8x128xf32>
    %cst_11 = arith.constant dense<0xFF800000> : vector<8xf32>
    %14 = vector.multi_reduction <maximumf>, %13, %cst_11 [1] : vector<8x128xf32> to vector<8xf32>
    %15 = vector.shape_cast %14 : vector<8xf32> to vector<8x1xf32>
    %16 = vector.broadcast %15 : vector<8x1xf32> to vector<8x128xf32>
    %17 = arith.subf %13, %16 : vector<8x128xf32>
    %18 = math.exp %17 : vector<8x128xf32>
    %cst_12 = arith.constant dense<0.000000e+00> : vector<8xf32>
    %19 = vector.multi_reduction <add>, %18, %cst_12 [1] : vector<8x128xf32> to vector<8xf32>
    %20 = vector.shape_cast %19 : vector<8xf32> to vector<8x1xf32>
    %21 = tpu.reciprocal %20 {approx = true} : vector<8x1xf32> -> vector<8x1xf32>
    %22 = vector.broadcast %21 : vector<8x1xf32> to vector<8x128xf32>
    %23 = arith.mulf %18, %22 : vector<8x128xf32>
    %c0_13 = arith.constant 0 : index
    %c0_14 = arith.constant 0 : index
    %24 = vector.load %arg6[%c0_13, %c0_14] : memref<8x128xf32, #tpu.memory_space<vmem>>, vector<8x128xf32>
    tpu.vector_store %arg6[%c0_13, %c0_14], %23 {strides = array<i32>} : memref<8x128xf32, #tpu.memory_space<vmem>>, vector<8x128xf32>,
    return
  }
  func.func @transform_0(%arg0: i32) -> (i32, i32) {
    %c0_i32 = arith.constant 0 : i32
    %c0_i32_0 = arith.constant 0 : i32
    return %arg0, %c0_i32 : i32, i32
  }
  func.func @transform_1(%arg0: i32) -> (i32, i32) {
    %c0_i32 = arith.constant 0 : i32
    %c0_i32_0 = arith.constant 0 : i32
    %c0_i32_1 = arith.constant 0 : i32
    return %c0_i32, %c0_i32_0 : i32, i32
  }
  func.func @transform_2(%arg0: i32) -> (i32, i32) {
    %c0_i32 = arith.constant 0 : i32
    %c0_i32_0 = arith.constant 0 : i32
    %c0_i32_1 = arith.constant 0 : i32
    return %c0_i32, %c0_i32_0 : i32, i32
  }
  func.func @transform_3(%arg0: i32) -> (i32, i32) {
    %c0_i32 = arith.constant 0 : i32
    %c0_i32_0 = arith.constant 0 : i32
    %c0_i32_1 = arith.constant 0 : i32
    return %c0_i32, %c0_i32_0 : i32, i32
  }
  func.func @transform_4(%arg0: i32) -> (i32, i32) {
    %c0_i32 = arith.constant 0 : i32
    %c0_i32_0 = arith.constant 0 : i32
    %c0_i32_1 = arith.constant 0 : i32
    return %c0_i32, %c0_i32_0 : i32, i32
  }
  func.func @transform_5(%arg0: i32) -> (i32, i32) {
    %c0_i32 = arith.constant 0 : i32
    %c0_i32_0 = arith.constant 0 : i32
    return %arg0, %c0_i32 : i32, i32
  }
}

</mosaic_0001>

<llo_original>
// kernel: tpu_custom_call.1
$region0: #{tpu_custom_call.1}
  #allocation0 [shape = 'u32[]', space=smem, size = 0x4, offset = 0x4, fixed_abs, tag = 'smem constant byte address 0x4 - core index']
  #allocation1 [shape = 'u32[144,128]{1,0:T(1,128)}', space=vmem, size = 0x12000, scoped, tag = 'internal scratch']
  %s0 = inlined_call_operand.hbm [shape: bf16[8,784], index: 0, kind: input, shape index: {}]
  %s1 = inlined_call_operand.hbm [shape: bf16[784,256], index: 1, kind: input, shape index: {}]
  %s2 = inlined_call_operand.vmem [shape: f32[1,256], index: 2, kind: input, shape index: {}]
  %s3 = inlined_call_operand.hbm [shape: bf16[256,128], index: 3, kind: input, shape index: {}]
  %s4 = inlined_call_operand.vmem [shape: f32[1,128], index: 4, kind: input, shape index: {}]
  %s5 = inlined_call_operand.hbm [shape: f32[8,128], index: 5, kind: output, shape index: {}]
  %s6 = sld [smem:[#allocation0]]
  $region42: #{tpu_custom_call.1} parent=0
    _
  %s8 = ssub.s32 1, %s6
  %s9 = scalar_select 0, %s8, %s6
  $region1: #{tpu_custom_call.1} parent=0
    #allocation2 [shape = 'u8[14336]{0}', space=vmem, size = 0x3800, scoped, tag = 'input window, operand 0, single buffered']
    #allocation3 [shape = 's32[1]{0}', space=sflag, size = 0x4, scoped, tag = 'scoped memory for tpu_custom_call.1']
    #allocation4 [shape = 's32[1]{0}', space=sflag, size = 0x4, scoped, tag = 'scoped memory for tpu_custom_call.1']
    #allocation5 [shape = 'u8[401408]{0}', space=vmem, size = 0x62000, scoped, tag = 'input window, operand 1, single buffered']
    #allocation6 [shape = 's32[1]{0}', space=sflag, size = 0x4, scoped, tag = 'scoped memory for tpu_custom_call.1']
    #allocation7 [shape = 'u8[65536]{0}', space=vmem, size = 0x10000, scoped, tag = 'input window, operand 3, single buffered']
    #allocation8 [shape = 'u8[4096]{0}', space=vmem, size = 0x1000, scoped, tag = 'output window, operand 0, single buffered']
    %10 = vsyncpa [#allocation3], 0
    %11 = vsyncpa [#allocation6], 0
    %12 = vsyncpa [#allocation4], 0
    // Predicated region
    $region2: #{tpu_custom_call.1} parent=1 // pred_check
      _
    $region3: #{tpu_custom_call.1} parent=1 // pred_check_branch
      %14 = sbr.rel (0) target = $region5
    $region4: #{tpu_custom_call.1} parent=1 // pred_region
      %s16 = ssub.s32 448, 448
      %17 = vsyncadd [#allocation3], %s16
      %s19 = sshll.u32 [#allocation2], 4
      %s20 = int_to_ptr.vmem [resolvable:$true] %s19
      %22 = dma.hbm_to_vmem [thread:$0]  %s0, 448, %s20, [#allocation3]
    $region5: #{tpu_custom_call.1} parent=1 // pred_fallthru
      _
    // Predicated region
    $region6: #{tpu_custom_call.1} parent=1 // pred_check
      _
    $region7: #{tpu_custom_call.1} parent=1 // pred_check_branch
      %24 = sbr.rel (0) target = $region9
    $region8: #{tpu_custom_call.1} parent=1 // pred_region
      %s26 = ssub.s32 12544, 12544
      %27 = vsyncadd [#allocation6], %s26
      %s28 = sshll.u32 [#allocation5], 4
      %s29 = int_to_ptr.vmem [resolvable:$true] %s28
      %34 = dma.hbm_to_vmem [thread:$0]  %s1, 12544, %s29, [#allocation6], 128, 128, 8
    $region9: #{tpu_custom_call.1} parent=1 // pred_fallthru
      _
    // Predicated region
    $region10: #{tpu_custom_call.1} parent=1 // pred_check
      _
    $region11: #{tpu_custom_call.1} parent=1 // pred_check_branch
      %36 = sbr.rel (0) target = $region13
    $region12: #{tpu_custom_call.1} parent=1 // pred_region
      _
    $region13: #{tpu_custom_call.1} parent=1 // pred_fallthru
      _
    // Predicated region
    $region14: #{tpu_custom_call.1} parent=1 // pred_check
      _
    $region15: #{tpu_custom_call.1} parent=1 // pred_check_branch
      %38 = sbr.rel (0) target = $region17
    $region16: #{tpu_custom_call.1} parent=1 // pred_region
      %s40 = ssub.s32 2048, 2048
      %41 = vsyncadd [#allocation6], %s40
      %s42 = sshll.u32 [#allocation7], 4
      %s43 = int_to_ptr.vmem [resolvable:$true] %s42
      %48 = dma.hbm_to_vmem [thread:$0]  %s3, 2048, %s43, [#allocation6], 64, 64, 4
    $region17: #{tpu_custom_call.1} parent=1 // pred_fallthru
      _
    // Predicated region
    $region18: #{tpu_custom_call.1} parent=1 // pred_check
      _
    $region19: #{tpu_custom_call.1} parent=1 // pred_check_branch
      %50 = sbr.rel (0) target = $region21
    $region20: #{tpu_custom_call.1} parent=1 // pred_region
      _
    $region21: #{tpu_custom_call.1} parent=1 // pred_fallthru
      _
    // Predicated region
    $region22: #{tpu_custom_call.1} parent=1 // pred_check
      _
    $region23: #{tpu_custom_call.1} parent=1 // pred_check_branch
      %52 = sbr.rel (0) target = $region25
    $region24: #{tpu_custom_call.1} parent=1 // pred_region
      %53 = dma.done [#allocation3], 448
    $region25: #{tpu_custom_call.1} parent=1 // pred_fallthru
      _
    // Predicated region
    $region26: #{tpu_custom_call.1} parent=1 // pred_check
      _
    $region27: #{tpu_custom_call.1} parent=1 // pred_check_branch
      %55 = sbr.rel (0) target = $region29
    $region28: #{tpu_custom_call.1} parent=1 // pred_region
      %56 = dma.done [#allocation6], 12544
    $region29: #{tpu_custom_call.1} parent=1 // pred_fallthru
      _
    // Predicated region
    $region30: #{tpu_custom_call.1} parent=1 // pred_check
      _
    $region31: #{tpu_custom_call.1} parent=1 // pred_check_branch
      %58 = sbr.rel (0) target = $region33
    $region32: #{tpu_custom_call.1} parent=1 // pred_region
      %59 = dma.done [#allocation6], 2048
    $region33: #{tpu_custom_call.1} parent=1 // pred_fallthru
      _
    %v61 = vld [vmem:[#allocation2] sm:$0xff]
    %v62 = vld [vmem:[#allocation2 + $0x8] sm:$0xff]
    %v63 = vld [vmem:[#allocation2 + $0x10] sm:$0xff]
    %v64 = vld [vmem:[#allocation2 + $0x18] sm:$0xf]
    %v65 = vld [vmem:[#allocation5] sm:$0xff]
    %v66 = vld [vmem:[#allocation5 + $0x8] sm:$0xff]
    %v67 = vld [vmem:[#allocation5 + $0x10] sm:$0xff]
    %v68 = vld [vmem:[#allocation5 + $0x18] sm:$0xff]
    %v69 = vld [vmem:[#allocation5 + $0x20] sm:$0xff]
    %v70 = vld [vmem:[#allocation5 + $0x28] sm:$0xff]
    %v71 = vld [vmem:[#allocation5 + $0x30] sm:$0xff]
    %v72 = vld [vmem:[#allocation5 + $0x38] sm:$0xff]
    %v73 = vld [vmem:[#allocation5 + $0x40] sm:$0xff]
    %v74 = vld [vmem:[#allocation5 + $0x48] sm:$0xff]
    %v75 = vld [vmem:[#allocation5 + $0x50] sm:$0xff]
    %v76 = vld [vmem:[#allocation5 + $0x58] sm:$0xff]
    %v77 = vld [vmem:[#allocation5 + $0x60] sm:$0xff]
    %v78 = vld [vmem:[#allocation5 + $0x68] sm:$0xff]
    %v79 = vld [vmem:[#allocation5 + $0x70] sm:$0xff]
    %v80 = vld [vmem:[#allocation5 + $0x78] sm:$0xff]
    %v81 = vld [vmem:[#allocation5 + $0x80] sm:$0xff]
    %v82 = vld [vmem:[#allocation5 + $0x88] sm:$0xff]
    %v83 = vld [vmem:[#allocation5 + $0x90] sm:$0xff]
    %v84 = vld [vmem:[#allocation5 + $0x98] sm:$0xff]
    %v85 = vld [vmem:[#allocation5 + $0xa0] sm:$0xff]
    %v86 = vld [vmem:[#allocation5 + $0xa8] sm:$0xff]
    %v87 = vld [vmem:[#allocation5 + $0xb0] sm:$0xff]
    %v88 = vld [vmem:[#allocation5 + $0xb8] sm:$0xff]
    %v89 = vld [vmem:[#allocation5 + $0xc0] sm:$0xff]
    %v90 = vld [vmem:[#allocation5 + $0xc8] sm:$0xff]
    %v91 = vld [vmem:[#allocation5 + $0xd0] sm:$0xff]
    %v92 = vld [vmem:[#allocation5 + $0xd8] sm:$0xff]
    %v93 = vld [vmem:[#allocation5 + $0xe0] sm:$0xff]
    %v94 = vld [vmem:[#allocation5 + $0xe8] sm:$0xff]
    %v95 = vld [vmem:[#allocation5 + $0xf0] sm:$0xff]
    %v96 = vld [vmem:[#allocation5 + $0xf8] sm:$0xff]
    %v97 = vld [vmem:[#allocation5 + $0x100] sm:$0xff]
    %v98 = vld [vmem:[#allocation5 + $0x108] sm:$0xff]
    %v99 = vld [vmem:[#allocation5 + $0x110] sm:$0xff]
    %v100 = vld [vmem:[#allocation5 + $0x118] sm:$0xff]
    %v101 = vld [vmem:[#allocation5 + $0x120] sm:$0xff]
    %v102 = vld [vmem:[#allocation5 + $0x128] sm:$0xff]
    %v103 = vld [vmem:[#allocation5 + $0x130] sm:$0xff]
    %v104 = vld [vmem:[#allocation5 + $0x138] sm:$0xff]
    %v105 = vld [vmem:[#allocation5 + $0x140] sm:$0xff]
    %v106 = vld [vmem:[#allocation5 + $0x148] sm:$0xff]
    %v107 = vld [vmem:[#allocation5 + $0x150] sm:$0xff]
    %v108 = vld [vmem:[#allocation5 + $0x158] sm:$0xff]
    %v109 = vld [vmem:[#allocation5 + $0x160] sm:$0xff]
    %v110 = vld [vmem:[#allocation5 + $0x168] sm:$0xff]
    %v111 = vld [vmem:[#allocation5 + $0x170] sm:$0xff]
    %v112 = vld [vmem:[#allocation5 + $0x178] sm:$0xff]
    %v113 = vld [vmem:[#allocation5 + $0x180] sm:$0xff]
    %v114 = vld [vmem:[#allocation5 + $0x188] sm:$0xff]
    %v115 = vld [vmem:[#allocation5 + $0x190] sm:$0xff]
    %v116 = vld [vmem:[#allocation5 + $0x198] sm:$0xff]
    %v117 = vld [vmem:[#allocation5 + $0x1a0] sm:$0xff]
    %v118 = vld [vmem:[#allocation5 + $0x1a8] sm:$0xff]
    %v119 = vld [vmem:[#allocation5 + $0x1b0] sm:$0xff]
    %v120 = vld [vmem:[#allocation5 + $0x1b8] sm:$0xff]
    %v121 = vld [vmem:[#allocation5 + $0x1c0] sm:$0xff]
    %v122 = vld [vmem:[#allocation5 + $0x1c8] sm:$0xff]
    %v123 = vld [vmem:[#allocation5 + $0x1d0] sm:$0xff]
    %v124 = vld [vmem:[#allocation5 + $0x1d8] sm:$0xff]
    %v125 = vld [vmem:[#allocation5 + $0x1e0] sm:$0xff]
    %v126 = vld [vmem:[#allocation5 + $0x1e8] sm:$0xff]
    %v127 = vld [vmem:[#allocation5 + $0x1f0] sm:$0xff]
    %v128 = vld [vmem:[#allocation5 + $0x1f8] sm:$0xff]
    %v129 = vld [vmem:[#allocation5 + $0x200] sm:$0xff]
    %v130 = vld [vmem:[#allocation5 + $0x208] sm:$0xff]
    %v131 = vld [vmem:[#allocation5 + $0x210] sm:$0xff]
    %v132 = vld [vmem:[#allocation5 + $0x218] sm:$0xff]
    %v133 = vld [vmem:[#allocation5 + $0x220] sm:$0xff]
    %v134 = vld [vmem:[#allocation5 + $0x228] sm:$0xff]
    %v135 = vld [vmem:[#allocation5 + $0x230] sm:$0xff]
    %v136 = vld [vmem:[#allocation5 + $0x238] sm:$0xff]
    %v137 = vld [vmem:[#allocation5 + $0x240] sm:$0xff]
    %v138 = vld [vmem:[#allocation5 + $0x248] sm:$0xff]
    %v139 = vld [vmem:[#allocation5 + $0x250] sm:$0xff]
    %v140 = vld [vmem:[#allocation5 + $0x258] sm:$0xff]
    %v141 = vld [vmem:[#allocation5 + $0x260] sm:$0xff]
    %v142 = vld [vmem:[#allocation5 + $0x268] sm:$0xff]
    %v143 = vld [vmem:[#allocation5 + $0x270] sm:$0xff]
    %v144 = vld [vmem:[#allocation5 + $0x278] sm:$0xff]
    %v145 = vld [vmem:[#allocation5 + $0x280] sm:$0xff]
    %v146 = vld [vmem:[#allocation5 + $0x288] sm:$0xff]
    %v147 = vld [vmem:[#allocation5 + $0x290] sm:$0xff]
    %v148 = vld [vmem:[#allocation5 + $0x298] sm:$0xff]
    %v149 = vld [vmem:[#allocation5 + $0x2a0] sm:$0xff]
    %v150 = vld [vmem:[#allocation5 + $0x2a8] sm:$0xff]
    %v151 = vld [vmem:[#allocation5 + $0x2b0] sm:$0xff]
    %v152 = vld [vmem:[#allocation5 + $0x2b8] sm:$0xff]
    %v153 = vld [vmem:[#allocation5 + $0x2c0] sm:$0xff]
    %v154 = vld [vmem:[#allocation5 + $0x2c8] sm:$0xff]
    %v155 = vld [vmem:[#allocation5 + $0x2d0] sm:$0xff]
    %v156 = vld [vmem:[#allocation5 + $0x2d8] sm:$0xff]
    %v157 = vld [vmem:[#allocation5 + $0x2e0] sm:$0xff]
    %v158 = vld [vmem:[#allocation5 + $0x2e8] sm:$0xff]
    %v159 = vld [vmem:[#allocation5 + $0x2f0] sm:$0xff]
    %v160 = vld [vmem:[#allocation5 + $0x2f8] sm:$0xff]
    %v161 = vld [vmem:[#allocation5 + $0x300] sm:$0xff]
    %v162 = vld [vmem:[#allocation5 + $0x308] sm:$0xff]
    %v163 = vld [vmem:[%s2] sm:$0x3]
    %v165 = vlaneseq
    %v166 = vshrl.u32 %v165, 7
    %v167 = vsub.s32 0, %v166
    %v168 = vrot.slane %v163, %v167
    %v169 = vlaneseq
    %v170 = vshrl.u32 %v169, 7
    %v171 = vsub.s32 1, %v170
    %v172 = vrot.slane %v163, %v171
    %v179 = vunpack.c.l.b16 %v61
    %v180 = vunpack.c.h.b16 %v61
    %v181 = vunpack.c.l.b16 %v62
    %v182 = vunpack.c.h.b16 %v62
    %v183 = vunpack.c.l.b16 %v63
    %v184 = vunpack.c.h.b16 %v63
    %v185 = vunpack.c.l.b16 %v64
    %v186 = vpack.c.b16 %v179, %v179
    %v187 = vpack.c.b16 %v180, %v180
    %v188 = vpack.c.b16 %v181, %v181
    %v189 = vpack.c.b16 %v182, %v182
    %v190 = vpack.c.b16 %v183, %v183
    %v191 = vpack.c.b16 %v184, %v184
    %v192 = vpack.c.b16 %v185, %v185
    %v297 = vunpack.c.l.b16 %v65
    %v298 = vunpack.c.h.b16 %v65
    %v299 = vunpack.c.l.b16 %v66
    %v300 = vunpack.c.h.b16 %v66
    %v301 = vunpack.c.l.b16 %v67
    %v302 = vunpack.c.h.b16 %v67
    %v303 = vunpack.c.l.b16 %v68
    %v304 = vunpack.c.h.b16 %v68
    %v305 = vunpack.c.l.b16 %v69
    %v306 = vunpack.c.h.b16 %v69
    %v307 = vunpack.c.l.b16 %v70
    %v308 = vunpack.c.h.b16 %v70
    %v309 = vunpack.c.l.b16 %v71
    %v310 = vunpack.c.h.b16 %v71
    %v311 = vunpack.c.l.b16 %v72
    %v312 = vunpack.c.h.b16 %v72
    %v313 = vunpack.c.l.b16 %v73
    %v314 = vunpack.c.h.b16 %v73
    %v315 = vunpack.c.l.b16 %v74
    %v316 = vunpack.c.h.b16 %v74
    %v317 = vunpack.c.l.b16 %v75
    %v318 = vunpack.c.h.b16 %v75
    %v319 = vunpack.c.l.b16 %v76
    %v320 = vunpack.c.h.b16 %v76
    %v321 = vunpack.c.l.b16 %v77
    %v322 = vunpack.c.h.b16 %v77
    %v323 = vunpack.c.l.b16 %v78
    %v324 = vunpack.c.h.b16 %v78
    %v325 = vunpack.c.l.b16 %v79
    %v326 = vunpack.c.h.b16 %v79
    %v327 = vunpack.c.l.b16 %v80
    %v328 = vunpack.c.h.b16 %v80
    %v329 = vunpack.c.l.b16 %v81
    %v330 = vunpack.c.h.b16 %v81
    %v331 = vunpack.c.l.b16 %v82
    %v332 = vunpack.c.h.b16 %v82
    %v333 = vunpack.c.l.b16 %v83
    %v334 = vunpack.c.h.b16 %v83
    %v335 = vunpack.c.l.b16 %v84
    %v336 = vunpack.c.h.b16 %v84
    %v337 = vunpack.c.l.b16 %v85
    %v338 = vunpack.c.h.b16 %v85
    %v339 = vunpack.c.l.b16 %v86
    %v340 = vunpack.c.h.b16 %v86
    %v341 = vunpack.c.l.b16 %v87
    %v342 = vunpack.c.h.b16 %v87
    %v343 = vunpack.c.l.b16 %v88
    %v344 = vunpack.c.h.b16 %v88
    %v345 = vunpack.c.l.b16 %v89
    %v346 = vunpack.c.h.b16 %v89
    %v347 = vunpack.c.l.b16 %v90
    %v348 = vunpack.c.h.b16 %v90
    %v349 = vunpack.c.l.b16 %v91
    %v350 = vunpack.c.h.b16 %v91
    %v351 = vunpack.c.l.b16 %v92
    %v352 = vunpack.c.h.b16 %v92
    %v353 = vunpack.c.l.b16 %v93
    %v354 = vunpack.c.h.b16 %v93
    %v355 = vunpack.c.l.b16 %v94
    %v356 = vunpack.c.h.b16 %v94
    %v357 = vunpack.c.l.b16 %v95
    %v358 = vunpack.c.h.b16 %v95
    %v359 = vunpack.c.l.b16 %v96
    %v360 = vunpack.c.h.b16 %v96
    %v361 = vunpack.c.l.b16 %v97
    %v362 = vunpack.c.h.b16 %v97
    %v363 = vunpack.c.l.b16 %v98
    %v364 = vunpack.c.h.b16 %v98
    %v365 = vunpack.c.l.b16 %v99
    %v366 = vunpack.c.h.b16 %v99
    %v367 = vunpack.c.l.b16 %v100
    %v368 = vunpack.c.h.b16 %v100
    %v369 = vunpack.c.l.b16 %v101
    %v370 = vunpack.c.h.b16 %v101
    %v371 = vunpack.c.l.b16 %v102
    %v372 = vunpack.c.h.b16 %v102
    %v373 = vunpack.c.l.b16 %v103
    %v374 = vunpack.c.h.b16 %v103
    %v375 = vunpack.c.l.b16 %v104
    %v376 = vunpack.c.h.b16 %v104
    %v377 = vunpack.c.l.b16 %v105
    %v378 = vunpack.c.h.b16 %v105
    %v379 = vunpack.c.l.b16 %v106
    %v380 = vunpack.c.h.b16 %v106
    %v381 = vunpack.c.l.b16 %v107
    %v382 = vunpack.c.h.b16 %v107
    %v383 = vunpack.c.l.b16 %v108
    %v384 = vunpack.c.h.b16 %v108
    %v385 = vunpack.c.l.b16 %v109
    %v386 = vunpack.c.h.b16 %v109
    %v387 = vunpack.c.l.b16 %v110
    %v388 = vunpack.c.h.b16 %v110
    %v389 = vunpack.c.l.b16 %v111
    %v390 = vunpack.c.h.b16 %v111
    %v391 = vunpack.c.l.b16 %v112
    %v392 = vunpack.c.h.b16 %v112
    %v393 = vunpack.c.l.b16 %v113
    %v394 = vunpack.c.h.b16 %v113
    %v395 = vunpack.c.l.b16 %v114
    %v396 = vunpack.c.h.b16 %v114
    %v397 = vunpack.c.l.b16 %v115
    %v398 = vunpack.c.h.b16 %v115
    %v399 = vunpack.c.l.b16 %v116
    %v400 = vunpack.c.h.b16 %v116
    %v401 = vunpack.c.l.b16 %v117
    %v402 = vunpack.c.h.b16 %v117
    %v403 = vunpack.c.l.b16 %v118
    %v404 = vunpack.c.h.b16 %v118
    %v405 = vunpack.c.l.b16 %v119
    %v406 = vunpack.c.h.b16 %v119
    %v407 = vunpack.c.l.b16 %v120
    %v408 = vunpack.c.h.b16 %v120
    %v409 = vunpack.c.l.b16 %v121
    %v410 = vunpack.c.h.b16 %v121
    %v411 = vunpack.c.l.b16 %v122
    %v412 = vunpack.c.h.b16 %v122
    %v413 = vunpack.c.l.b16 %v123
    %v414 = vunpack.c.h.b16 %v123
    %v415 = vunpack.c.l.b16 %v124
    %v416 = vunpack.c.h.b16 %v124
    %v417 = vunpack.c.l.b16 %v125
    %v418 = vunpack.c.h.b16 %v125
    %v419 = vunpack.c.l.b16 %v126
    %v420 = vunpack.c.h.b16 %v126
    %v421 = vunpack.c.l.b16 %v127
    %v422 = vunpack.c.h.b16 %v127
    %v423 = vunpack.c.l.b16 %v128
    %v424 = vunpack.c.h.b16 %v128
    %v425 = vunpack.c.l.b16 %v129
    %v426 = vunpack.c.h.b16 %v129
    %v427 = vunpack.c.l.b16 %v130
    %v428 = vunpack.c.h.b16 %v130
    %v429 = vunpack.c.l.b16 %v131
    %v430 = vunpack.c.h.b16 %v131
    %v431 = vunpack.c.l.b16 %v132
    %v432 = vunpack.c.h.b16 %v132
    %v433 = vunpack.c.l.b16 %v133
    %v434 = vunpack.c.h.b16 %v133
    %v435 = vunpack.c.l.b16 %v134
    %v436 = vunpack.c.h.b16 %v134
    %v437 = vunpack.c.l.b16 %v135
    %v438 = vunpack.c.h.b16 %v135
    %v439 = vunpack.c.l.b16 %v136
    %v440 = vunpack.c.h.b16 %v136
    %v441 = vunpack.c.l.b16 %v137
    %v442 = vunpack.c.h.b16 %v137
    %v443 = vunpack.c.l.b16 %v138
    %v444 = vunpack.c.h.b16 %v138
    %v445 = vunpack.c.l.b16 %v139
    %v446 = vunpack.c.h.b16 %v139
    %v447 = vunpack.c.l.b16 %v140
    %v448 = vunpack.c.h.b16 %v140
    %v449 = vunpack.c.l.b16 %v141
    %v450 = vunpack.c.h.b16 %v141
    %v451 = vunpack.c.l.b16 %v142
    %v452 = vunpack.c.h.b16 %v142
    %v453 = vunpack.c.l.b16 %v143
    %v454 = vunpack.c.h.b16 %v143
    %v455 = vunpack.c.l.b16 %v144
    %v456 = vunpack.c.h.b16 %v144
    %v457 = vunpack.c.l.b16 %v145
    %v458 = vunpack.c.h.b16 %v145
    %v459 = vunpack.c.l.b16 %v146
    %v460 = vunpack.c.h.b16 %v146
    %v461 = vunpack.c.l.b16 %v147
    %v462 = vunpack.c.h.b16 %v147
    %v463 = vunpack.c.l.b16 %v148
    %v464 = vunpack.c.h.b16 %v148
    %v465 = vunpack.c.l.b16 %v149
    %v466 = vunpack.c.h.b16 %v149
    %v467 = vunpack.c.l.b16 %v150
    %v468 = vunpack.c.h.b16 %v150
    %v469 = vunpack.c.l.b16 %v151
    %v470 = vunpack.c.h.b16 %v151
    %v471 = vunpack.c.l.b16 %v152
    %v472 = vunpack.c.h.b16 %v152
    %v473 = vunpack.c.l.b16 %v153
    %v474 = vunpack.c.h.b16 %v153
    %v475 = vunpack.c.l.b16 %v154
    %v476 = vunpack.c.h.b16 %v154
    %v477 = vunpack.c.l.b16 %v155
    %v478 = vunpack.c.h.b16 %v155
    %v479 = vunpack.c.l.b16 %v156
    %v480 = vunpack.c.h.b16 %v156
    %v481 = vunpack.c.l.b16 %v157
    %v482 = vunpack.c.h.b16 %v157
    %v483 = vunpack.c.l.b16 %v158
    %v484 = vunpack.c.h.b16 %v158
    %v485 = vunpack.c.l.b16 %v159
    %v486 = vunpack.c.h.b16 %v159
    %v487 = vunpack.c.l.b16 %v160
    %v488 = vunpack.c.h.b16 %v160
    %v489 = vunpack.c.l.b16 %v161
    %v490 = vunpack.c.h.b16 %v161
    %v491 = vunpack.c.l.b16 %v162
    %v492 = vunpack.c.h.b16 %v162
    %v493 = vpack.c.b16 %v299, %v297
    %v494 = vpack.c.b16 %v300, %v298
    %v495 = vpack.c.b16 %v303, %v301
    %v496 = vpack.c.b16 %v304, %v302
    %v497 = vpack.c.b16 %v307, %v305
    %v498 = vpack.c.b16 %v308, %v306
    %v499 = vpack.c.b16 %v311, %v309
    %v500 = vpack.c.b16 %v312, %v310
    %v501 = vpack.c.b16 %v315, %v313
    %v502 = vpack.c.b16 %v316, %v314
    %v503 = vpack.c.b16 %v319, %v317
    %v504 = vpack.c.b16 %v320, %v318
    %v505 = vpack.c.b16 %v323, %v321
    %v506 = vpack.c.b16 %v324, %v322
    %v507 = vpack.c.b16 %v327, %v325
    %v508 = vpack.c.b16 %v328, %v326
    %v509 = vpack.c.b16 %v331, %v329
    %v510 = vpack.c.b16 %v332, %v330
    %v511 = vpack.c.b16 %v335, %v333
    %v512 = vpack.c.b16 %v336, %v334
    %v513 = vpack.c.b16 %v339, %v337
    %v514 = vpack.c.b16 %v340, %v338
    %v515 = vpack.c.b16 %v343, %v341
    %v516 = vpack.c.b16 %v344, %v342
    %v517 = vpack.c.b16 %v347, %v345
    %v518 = vpack.c.b16 %v348, %v346
    %v519 = vpack.c.b16 %v351, %v349
    %v520 = vpack.c.b16 %v352, %v350
    %v521 = vpack.c.b16 %v355, %v353
    %v522 = vpack.c.b16 %v356, %v354
    %v523 = vpack.c.b16 %v359, %v357
    %v524 = vpack.c.b16 %v360, %v358
    %v525 = vpack.c.b16 %v363, %v361
    %v526 = vpack.c.b16 %v364, %v362
    %v527 = vpack.c.b16 %v367, %v365
    %v528 = vpack.c.b16 %v368, %v366
    %v529 = vpack.c.b16 %v371, %v369
    %v530 = vpack.c.b16 %v372, %v370
    %v531 = vpack.c.b16 %v375, %v373
    %v532 = vpack.c.b16 %v376, %v374
    %v533 = vpack.c.b16 %v379, %v377
    %v534 = vpack.c.b16 %v380, %v378
    %v535 = vpack.c.b16 %v383, %v381
    %v536 = vpack.c.b16 %v384, %v382
    %v537 = vpack.c.b16 %v387, %v385
    %v538 = vpack.c.b16 %v388, %v386
    %v539 = vpack.c.b16 %v391, %v389
    %v540 = vpack.c.b16 %v392, %v390
    %v541 = vpack.c.b16 %v395, %v393
    %v542 = vpack.c.b16 %v396, %v394
    %v543 = vpack.c.b16 %v399, %v397
    %v544 = vpack.c.b16 %v400, %v398
    %v545 = vpack.c.b16 %v403, %v401
    %v546 = vpack.c.b16 %v404, %v402
    %v547 = vpack.c.b16 %v407, %v405
    %v548 = vpack.c.b16 %v408, %v406
    %v549 = vpack.c.b16 %v411, %v409
    %v550 = vpack.c.b16 %v412, %v410
    %v551 = vpack.c.b16 %v415, %v413
    %v552 = vpack.c.b16 %v416, %v414
    %v553 = vpack.c.b16 %v419, %v417
    %v554 = vpack.c.b16 %v420, %v418
    %v555 = vpack.c.b16 %v423, %v421
    %v556 = vpack.c.b16 %v424, %v422
    %v557 = vpack.c.b16 %v427, %v425
    %v558 = vpack.c.b16 %v428, %v426
    %v559 = vpack.c.b16 %v431, %v429
    %v560 = vpack.c.b16 %v432, %v430
    %v561 = vpack.c.b16 %v435, %v433
    %v562 = vpack.c.b16 %v436, %v434
    %v563 = vpack.c.b16 %v439, %v437
    %v564 = vpack.c.b16 %v440, %v438
    %v565 = vpack.c.b16 %v443, %v441
    %v566 = vpack.c.b16 %v444, %v442
    %v567 = vpack.c.b16 %v447, %v445
    %v568 = vpack.c.b16 %v448, %v446
    %v569 = vpack.c.b16 %v451, %v449
    %v570 = vpack.c.b16 %v452, %v450
    %v571 = vpack.c.b16 %v455, %v453
    %v572 = vpack.c.b16 %v456, %v454
    %v573 = vpack.c.b16 %v459, %v457
    %v574 = vpack.c.b16 %v460, %v458
    %v575 = vpack.c.b16 %v463, %v461
    %v576 = vpack.c.b16 %v464, %v462
    %v577 = vpack.c.b16 %v467, %v465
    %v578 = vpack.c.b16 %v468, %v466
    %v579 = vpack.c.b16 %v471, %v469
    %v580 = vpack.c.b16 %v472, %v470
    %v581 = vpack.c.b16 %v475, %v473
    %v582 = vpack.c.b16 %v476, %v474
    %v583 = vpack.c.b16 %v479, %v477
    %v584 = vpack.c.b16 %v480, %v478
    %v585 = vpack.c.b16 %v483, %v481
    %v586 = vpack.c.b16 %v484, %v482
    %v587 = vpack.c.b16 %v487, %v485
    %v588 = vpack.c.b16 %v488, %v486
    %v589 = vpack.c.b16 %v491, %v489
    %v590 = vpack.c.b16 %v492, %v490
    %vm689 = vcmask 130048
    %v691 = vsel %vm689, %v192, 0
    %693 = vmatprep.subr.bf16.mxu0 %v494
    %694 = vmatpush1.bf16.msra.mxu0 %v493
    %695 = vmatprep.subr.bf16.mxu0 %v496
    %696 = vmatpush1.bf16.msra.mxu0 %v495
    %697 = vmatprep.subr.bf16.mxu0 %v498
    %698 = vmatpush1.bf16.msra.mxu0 %v497
    %699 = vmatprep.subr.bf16.mxu0 %v500
    %700 = vmatpush1.bf16.msra.mxu0 %v499
    %701 = vmatprep.subr.bf16.mxu0 %v502
    %702 = vmatpush1.bf16.msra.mxu0 %v501
    %703 = vmatprep.subr.bf16.mxu0 %v504
    %704 = vmatpush1.bf16.msra.mxu0 %v503
    %705 = vmatprep.subr.bf16.mxu0 %v506
    %706 = vmatpush1.bf16.msra.mxu0 %v505
    %707 = vmatprep.subr.bf16.mxu0 %v508
    %708 = vmatpush1.bf16.msra.mxu0 %v507
    %709 = vmatprep.subr.bf16.mxu0 %v510
    %710 = vmatpush1.bf16.msra.mxu0 %v509
    %711 = vmatprep.subr.bf16.mxu0 %v512
    %712 = vmatpush1.bf16.msra.mxu0 %v511
    %713 = vmatprep.subr.bf16.mxu0 %v514
    %714 = vmatpush1.bf16.msra.mxu0 %v513
    %715 = vmatprep.subr.bf16.mxu0 %v516
    %716 = vmatpush1.bf16.msra.mxu0 %v515
    %717 = vmatprep.subr.bf16.mxu0 %v518
    %718 = vmatpush1.bf16.msra.mxu0 %v517
    %719 = vmatprep.subr.bf16.mxu0 %v520
    %720 = vmatpush1.bf16.msra.mxu0 %v519
    %721 = vmatprep.subr.bf16.mxu0 %v522
    %722 = vmatpush1.bf16.msra.mxu0 %v521
    %723 = vmatprep.subr.bf16.mxu0 %v524
    %724 = vmatpush1.bf16.msra.mxu0 %v523
    %725 = vmatprep.mubr.bf16.mxu0 %v187
    %726 = vmatmul.mubr.bf16.gmra.mrb[0].mxu0 %v186
    %v727 = vpop.f32.mrb[0].mxu0
    %v728 = vadd.f32 %v168, %v727
    %v729 = vpop.f32.mrb[0].mxu0
    %v730 = vadd.f32 %v172, %v729
    %v731 = vpop.f32.mrb[0].mxu0
    %v732 = vpop.f32.mrb[0].mxu0
    %733 = vdwg.mxu0
    %734 = vmatprep.subr.bf16.mxu0 %v526
    %735 = vmatpush1.bf16.msra.mxu0 %v525
    %736 = vmatprep.subr.bf16.mxu0 %v528
    %737 = vmatpush1.bf16.msra.mxu0 %v527
    %738 = vmatprep.subr.bf16.mxu0 %v530
    %739 = vmatpush1.bf16.msra.mxu0 %v529
    %740 = vmatprep.subr.bf16.mxu0 %v532
    %741 = vmatpush1.bf16.msra.mxu0 %v531
    %742 = vmatprep.subr.bf16.mxu0 %v534
    %743 = vmatpush1.bf16.msra.mxu0 %v533
    %744 = vmatprep.subr.bf16.mxu0 %v536
    %745 = vmatpush1.bf16.msra.mxu0 %v535
    %746 = vmatprep.subr.bf16.mxu0 %v538
    %747 = vmatpush1.bf16.msra.mxu0 %v537
    %748 = vmatprep.subr.bf16.mxu0 %v540
    %749 = vmatpush1.bf16.msra.mxu0 %v539
    %750 = vmatprep.subr.bf16.mxu0 %v542
    %751 = vmatpush1.bf16.msra.mxu0 %v541
    %752 = vmatprep.subr.bf16.mxu0 %v544
    %753 = vmatpush1.bf16.msra.mxu0 %v543
    %754 = vmatprep.subr.bf16.mxu0 %v546
    %755 = vmatpush1.bf16.msra.mxu0 %v545
    %756 = vmatprep.subr.bf16.mxu0 %v548
    %757 = vmatpush1.bf16.msra.mxu0 %v547
    %758 = vmatprep.subr.bf16.mxu0 %v550
    %759 = vmatpush1.bf16.msra.mxu0 %v549
    %760 = vmatprep.subr.bf16.mxu0 %v552
    %761 = vmatpush1.bf16.msra.mxu0 %v551
    %762 = vmatprep.subr.bf16.mxu0 %v554
    %763 = vmatpush1.bf16.msra.mxu0 %v553
    %764 = vmatprep.subr.bf16.mxu0 %v556
    %765 = vmatpush1.bf16.msra.mxu0 %v555
    %766 = vmatprep.mubr.bf16.mxu0 %v189
    %767 = vmatmul.mubr.bf16.gmra.mrb[0].mxu0 %v188
    %v768 = vpop.f32.mrb[0].mxu0
    %v769 = vadd.f32 %v728, %v768
    %v770 = vpop.f32.mrb[0].mxu0
    %v771 = vadd.f32 %v730, %v770
    %v772 = vpop.f32.mrb[0].mxu0
    %v773 = vpop.f32.mrb[0].mxu0
    %774 = vdwg.mxu0
    %775 = vmatprep.subr.bf16.mxu0 %v558
    %776 = vmatpush1.bf16.msra.mxu0 %v557
    %777 = vmatprep.subr.bf16.mxu0 %v560
    %778 = vmatpush1.bf16.msra.mxu0 %v559
    %779 = vmatprep.subr.bf16.mxu0 %v562
    %780 = vmatpush1.bf16.msra.mxu0 %v561
    %781 = vmatprep.subr.bf16.mxu0 %v564
    %782 = vmatpush1.bf16.msra.mxu0 %v563
    %783 = vmatprep.subr.bf16.mxu0 %v566
    %784 = vmatpush1.bf16.msra.mxu0 %v565
    %785 = vmatprep.subr.bf16.mxu0 %v568
    %786 = vmatpush1.bf16.msra.mxu0 %v567
    %787 = vmatprep.subr.bf16.mxu0 %v570
    %788 = vmatpush1.bf16.msra.mxu0 %v569
    %789 = vmatprep.subr.bf16.mxu0 %v572
    %790 = vmatpush1.bf16.msra.mxu0 %v571
    %791 = vmatprep.subr.bf16.mxu0 %v574
    %792 = vmatpush1.bf16.msra.mxu0 %v573
    %793 = vmatprep.subr.bf16.mxu0 %v576
    %794 = vmatpush1.bf16.msra.mxu0 %v575
    %795 = vmatprep.subr.bf16.mxu0 %v578
    %796 = vmatpush1.bf16.msra.mxu0 %v577
    %797 = vmatprep.subr.bf16.mxu0 %v580
    %798 = vmatpush1.bf16.msra.mxu0 %v579
    %799 = vmatprep.subr.bf16.mxu0 %v582
    %800 = vmatpush1.bf16.msra.mxu0 %v581
    %801 = vmatprep.subr.bf16.mxu0 %v584
    %802 = vmatpush1.bf16.msra.mxu0 %v583
    %803 = vmatprep.subr.bf16.mxu0 %v586
    %804 = vmatpush1.bf16.msra.mxu0 %v585
    %805 = vmatprep.subr.bf16.mxu0 %v588
    %806 = vmatpush1.bf16.msra.mxu0 %v587
    %807 = vmatprep.mubr.bf16.mxu0 %v191
    %808 = vmatmul.mubr.bf16.gmra.mrb[0].mxu0 %v190
    %v809 = vpop.f32.mrb[0].mxu0
    %v810 = vadd.f32 %v769, %v809
    %v811 = vpop.f32.mrb[0].mxu0
    %v812 = vadd.f32 %v771, %v811
    %v813 = vpop.f32.mrb[0].mxu0
    %v814 = vpop.f32.mrb[0].mxu0
    %815 = vdwg.mxu0
    %816 = vmatprep.subr.bf16.mxu0 %v590
    %817 = vmatpush1.bf16.msra.mxu0 %v589
    %818 = vmatprep.subr.bf16.mxu0 0
    %819 = vmatpush1.bf16.msra.mxu0 0
    %820 = vmatprep.subr.bf16.mxu0 0
    %821 = vmatpush1.bf16.msra.mxu0 0
    %822 = vmatprep.subr.bf16.mxu0 0
    %823 = vmatpush1.bf16.msra.mxu0 0
    %824 = vmatprep.subr.bf16.mxu0 0
    %825 = vmatpush1.bf16.msra.mxu0 0
    %826 = vmatprep.subr.bf16.mxu0 0
    %827 = vmatpush1.bf16.msra.mxu0 0
    %828 = vmatprep.subr.bf16.mxu0 0
    %829 = vmatpush1.bf16.msra.mxu0 0
    %830 = vmatprep.subr.bf16.mxu0 0
    %831 = vmatpush1.bf16.msra.mxu0 0
    %832 = vmatprep.subr.bf16.mxu0 0
    %833 = vmatpush1.bf16.msra.mxu0 0
    %834 = vmatprep.subr.bf16.mxu0 0
    %835 = vmatpush1.bf16.msra.mxu0 0
    %836 = vmatprep.subr.bf16.mxu0 0
    %837 = vmatpush1.bf16.msra.mxu0 0
    %838 = vmatprep.subr.bf16.mxu0 0
    %839 = vmatpush1.bf16.msra.mxu0 0
    %840 = vmatprep.subr.bf16.mxu0 0
    %841 = vmatpush1.bf16.msra.mxu0 0
    %842 = vmatprep.subr.bf16.mxu0 0
    %843 = vmatpush1.bf16.msra.mxu0 0
    %844 = vmatprep.subr.bf16.mxu0 0
    %845 = vmatpush1.bf16.msra.mxu0 0
    %846 = vmatprep.subr.bf16.mxu0 0
    %847 = vmatpush1.bf16.msra.mxu0 0
    %848 = vmatprep.mubr.bf16.mxu0 0
    %849 = vmatmul.mubr.bf16.gmra.mrb[0].mxu0 %v691
    %v850 = vpop.f32.mrb[0].mxu0
    %v851 = vadd.f32 %v810, %v850
    %v852 = vpop.f32.mrb[0].mxu0
    %v853 = vadd.f32 %v812, %v852
    %v854 = vpop.f32.mrb[0].mxu0
    %v855 = vpop.f32.mrb[0].mxu0
    %856 = vdwg.mxu0
    %v857 = vmax.f32 %v851, 0.0
    %v858 = vmax.f32 %v853, 0.0
    %v859 = vpack.c.bf16 %v857, %v857
    %v860 = vpack.c.bf16 %v858, %v858
    %v861 = vld [vmem:[#allocation7] sm:$0xf]
    %v862 = vld [vmem:[#allocation7 + $0x4] sm:$0xf]
    %v863 = vld [vmem:[#allocation7 + $0x8] sm:$0xf]
    %v864 = vld [vmem:[#allocation7 + $0xc] sm:$0xf]
    %v865 = vld [vmem:[#allocation7 + $0x10] sm:$0xf]
    %v866 = vld [vmem:[#allocation7 + $0x14] sm:$0xf]
    %v867 = vld [vmem:[#allocation7 + $0x18] sm:$0xf]
    %v868 = vld [vmem:[#allocation7 + $0x1c] sm:$0xf]
    %v869 = vld [vmem:[#allocation7 + $0x20] sm:$0xf]
    %v870 = vld [vmem:[#allocation7 + $0x24] sm:$0xf]
    %v871 = vld [vmem:[#allocation7 + $0x28] sm:$0xf]
    %v872 = vld [vmem:[#allocation7 + $0x2c] sm:$0xf]
    %v873 = vld [vmem:[#allocation7 + $0x30] sm:$0xf]
    %v874 = vld [vmem:[#allocation7 + $0x34] sm:$0xf]
    %v875 = vld [vmem:[#allocation7 + $0x38] sm:$0xf]
    %v876 = vld [vmem:[#allocation7 + $0x3c] sm:$0xf]
    %v877 = vld [vmem:[#allocation7 + $0x40] sm:$0xf]
    %v878 = vld [vmem:[#allocation7 + $0x44] sm:$0xf]
    %v879 = vld [vmem:[#allocation7 + $0x48] sm:$0xf]
    %v880 = vld [vmem:[#allocation7 + $0x4c] sm:$0xf]
    %v881 = vld [vmem:[#allocation7 + $0x50] sm:$0xf]
    %v882 = vld [vmem:[#allocation7 + $0x54] sm:$0xf]
    %v883 = vld [vmem:[#allocation7 + $0x58] sm:$0xf]
    %v884 = vld [vmem:[#allocation7 + $0x5c] sm:$0xf]
    %v885 = vld [vmem:[#allocation7 + $0x60] sm:$0xf]
    %v886 = vld [vmem:[#allocation7 + $0x64] sm:$0xf]
    %v887 = vld [vmem:[#allocation7 + $0x68] sm:$0xf]
    %v888 = vld [vmem:[#allocation7 + $0x6c] sm:$0xf]
    %v889 = vld [vmem:[#allocation7 + $0x70] sm:$0xf]
    %v890 = vld [vmem:[#allocation7 + $0x74] sm:$0xf]
    %v891 = vld [vmem:[#allocation7 + $0x78] sm:$0xf]
    %v892 = vld [vmem:[#allocation7 + $0x7c] sm:$0xf]
    %v893 = vld [vmem:[%s4] sm:$0x1]
    %v895 = vlaneseq
    %v896 = vshrl.u32 %v895, 7
    %v897 = vsub.s32 0, %v896
    %v898 = vrot.slane %v893, %v897
    %v932 = vunpack.c.l.b16 %v861
    %v933 = vunpack.c.l.b16 %v862
    %v934 = vunpack.c.l.b16 %v863
    %v935 = vunpack.c.l.b16 %v864
    %v936 = vunpack.c.l.b16 %v865
    %v937 = vunpack.c.l.b16 %v866
    %v938 = vunpack.c.l.b16 %v867
    %v939 = vunpack.c.l.b16 %v868
    %v940 = vunpack.c.l.b16 %v869
    %v941 = vunpack.c.l.b16 %v870
    %v942 = vunpack.c.l.b16 %v871
    %v943 = vunpack.c.l.b16 %v872
    %v944 = vunpack.c.l.b16 %v873
    %v945 = vunpack.c.l.b16 %v874
    %v946 = vunpack.c.l.b16 %v875
    %v947 = vunpack.c.l.b16 %v876
    %v948 = vunpack.c.l.b16 %v877
    %v949 = vunpack.c.l.b16 %v878
    %v950 = vunpack.c.l.b16 %v879
    %v951 = vunpack.c.l.b16 %v880
    %v952 = vunpack.c.l.b16 %v881
    %v953 = vunpack.c.l.b16 %v882
    %v954 = vunpack.c.l.b16 %v883
    %v955 = vunpack.c.l.b16 %v884
    %v956 = vunpack.c.l.b16 %v885
    %v957 = vunpack.c.l.b16 %v886
    %v958 = vunpack.c.l.b16 %v887
    %v959 = vunpack.c.l.b16 %v888
    %v960 = vunpack.c.l.b16 %v889
    %v961 = vunpack.c.l.b16 %v890
    %v962 = vunpack.c.l.b16 %v891
    %v963 = vunpack.c.l.b16 %v892
    %v964 = vpack.c.b16 %v933, %v932
    %v965 = vpack.c.b16 %v935, %v934
    %v966 = vpack.c.b16 %v937, %v936
    %v967 = vpack.c.b16 %v939, %v938
    %v968 = vpack.c.b16 %v941, %v940
    %v969 = vpack.c.b16 %v943, %v942
    %v970 = vpack.c.b16 %v945, %v944
    %v971 = vpack.c.b16 %v947, %v946
    %v972 = vpack.c.b16 %v949, %v948
    %v973 = vpack.c.b16 %v951, %v950
    %v974 = vpack.c.b16 %v953, %v952
    %v975 = vpack.c.b16 %v955, %v954
    %v976 = vpack.c.b16 %v957, %v956
    %v977 = vpack.c.b16 %v959, %v958
    %v978 = vpack.c.b16 %v961, %v960
    %v979 = vpack.c.b16 %v963, %v962
    %996 = vmatprep.subr.bf16.mxu0 0
    %997 = vmatpush1.bf16.msra.mxu0 %v964
    %998 = vmatprep.subr.bf16.mxu0 0
    %999 = vmatpush1.bf16.msra.mxu0 %v965
    %1000 = vmatprep.subr.bf16.mxu0 0
    %1001 = vmatpush1.bf16.msra.mxu0 %v966
    %1002 = vmatprep.subr.bf16.mxu0 0
    %1003 = vmatpush1.bf16.msra.mxu0 %v967
    %1004 = vmatprep.subr.bf16.mxu0 0
    %1005 = vmatpush1.bf16.msra.mxu0 %v968
    %1006 = vmatprep.subr.bf16.mxu0 0
    %1007 = vmatpush1.bf16.msra.mxu0 %v969
    %1008 = vmatprep.subr.bf16.mxu0 0
    %1009 = vmatpush1.bf16.msra.mxu0 %v970
    %1010 = vmatprep.subr.bf16.mxu0 0
    %1011 = vmatpush1.bf16.msra.mxu0 %v971
    %1012 = vmatprep.subr.bf16.mxu0 0
    %1013 = vmatpush1.bf16.msra.mxu0 %v972
    %1014 = vmatprep.subr.bf16.mxu0 0
    %1015 = vmatpush1.bf16.msra.mxu0 %v973
    %1016 = vmatprep.subr.bf16.mxu0 0
    %1017 = vmatpush1.bf16.msra.mxu0 %v974
    %1018 = vmatprep.subr.bf16.mxu0 0
    %1019 = vmatpush1.bf16.msra.mxu0 %v975
    %1020 = vmatprep.subr.bf16.mxu0 0
    %1021 = vmatpush1.bf16.msra.mxu0 %v976
    %1022 = vmatprep.subr.bf16.mxu0 0
    %1023 = vmatpush1.bf16.msra.mxu0 %v977
    %1024 = vmatprep.subr.bf16.mxu0 0
    %1025 = vmatpush1.bf16.msra.mxu0 %v978
    %1026 = vmatprep.subr.bf16.mxu0 0
    %1027 = vmatpush1.bf16.msra.mxu0 %v979
    %1028 = vmatprep.mubr.bf16.mxu0 %v860
    %1029 = vmatmul.mubr.bf16.gmra.mrb[0].mxu0 %v859
    %v1030 = vpop.f32.mrb[0].mxu0
    %v1031 = vadd.f32 %v898, %v1030
    %v1032 = vpop.f32.mrb[0].mxu0
    %v1033 = vpop.f32.mrb[0].mxu0
    %v1034 = vpop.f32.mrb[0].mxu0
    %1035 = vdwg.mxu0
    %1036 = vmax.xlane.f32.xlu0 %v1031
    %v1037 = vpop.xlane.xlu0 %1036
    %v1038 = vsub.f32 %v1031, %v1037
    %v1039 = vmul.f32 %v1038, 1.442695
    %v1040 = vpow.pop %v1039
    %1041 = vadd.xlane.f32.xlu0 %v1040
    %v1042 = vpop.xlane.xlu0 %1041
    %v1043 = vrcp.pop %v1042
    %v1044 = vmul.f32 %v1040, %v1043
    %1045 = vst [vmem:[#allocation8] sm:$0xff] %v1044
    // Predicated region
    $region34: #{tpu_custom_call.1} parent=1 // pred_check
      _
    $region35: #{tpu_custom_call.1} parent=1 // pred_check_branch
      %1047 = sbr.rel (0) target = $region37
    $region36: #{tpu_custom_call.1} parent=1 // pred_region
      %s1049 = ssub.s32 128, 128
      %1050 = vsyncadd [#allocation4], %s1049
      %s1052 = sshll.u32 [#allocation8], 4
      %s1053 = int_to_ptr.vmem [resolvable:$true] %s1052
      %1055 = dma.vmem_to_hbm [thread:$0]  %s1053, 128, %s5, [#allocation4]
    $region37: #{tpu_custom_call.1} parent=1 // pred_fallthru
      _
    // Predicated region
    $region38: #{tpu_custom_call.1} parent=1 // pred_check
      _
    $region39: #{tpu_custom_call.1} parent=1 // pred_check_branch
      %1057 = sbr.rel (0) target = $region41
    $region40: #{tpu_custom_call.1} parent=1 // pred_region
      %1058 = dma.done [#allocation4], 128
    $region41: #{tpu_custom_call.1} parent=1 // pred_fallthru
      _
    %1059 = vsyncpa [#allocation3], 1
    %1060 = vsyncpa [#allocation6], 1
    %1061 = vsyncpa [#allocation4], 1

</llo_original>
